<compile_context>
chip_gen: v6e
topology: v6e:2x2x1
jax: 0.10.0
libtpu: 0.0.40
codegen_flags: <defaults>
</compile_context>

<pallas_src>
import math

import jax
import jax.numpy as jnp
from jax.experimental import pallas as pl
from jax.experimental.pallas import tpu as pltpu


def _fused_noise_reduction_kernel(
    x_ref, s_ref,
    dw1_ref, db1_ref, dw2_ref, db2_ref, dw3_ref, db3_ref,
    sw1s_ref, sw1x_ref, sb1_ref, sw2_ref, sb2_ref, sw3_ref, sb3_ref,
    out_ref,
):
    cdt = dw1_ref.dtype          # matmul/compute dtype (bf16)
    x = x_ref[...]               # (tm, in_dim), already in compute dtype
    s = s_ref[...]
    tm = x.shape[0]
    out_dim = dw3_ref.shape[1]

    # ---- shared decoder, applied once to the row-stacked [x; s] block ------
    # (weight-stationary MXU: each weight push is amortized over 2*tm rows)
    v = jnp.concatenate([x, s], axis=0)                        # (2*tm, in_dim)
    h1 = jnp.dot(v, dw1_ref[...], preferred_element_type=jnp.float32) + db1_ref[...]
    h1 = jnp.maximum(h1, 0.0).astype(cdt)
    h2 = jnp.dot(h1, dw2_ref[...], preferred_element_type=jnp.float32) + db2_ref[...]
    h2 = jnp.maximum(h2, 0.0).astype(cdt)
    y = jnp.dot(h2, dw3_ref[...], preferred_element_type=jnp.float32) + db3_ref[...]

    # ---- sentence decoder on cat([s, x]) via the pre-split layer-1 weight --
    # cat @ W == s @ W[:in_dim] + x @ W[in_dim:]  (concat never materialized)
    g1 = (jnp.dot(s, sw1s_ref[...], preferred_element_type=jnp.float32)
          + jnp.dot(x, sw1x_ref[...], preferred_element_type=jnp.float32)
          + sb1_ref[...])
    g1 = jnp.maximum(g1, 0.0).astype(cdt)
    g2 = jnp.dot(g1, sw2_ref[...], preferred_element_type=jnp.float32) + sb2_ref[...]
    g2 = jnp.maximum(g2, 0.0).astype(cdt)
    y_sent = jnp.dot(g2, sw3_ref[...], preferred_element_type=jnp.float32) + sb3_ref[...]

    # ---- single packed output: [logits | sentence_logits | noise_logits] ---
    out_ref[:, :out_dim] = y[:tm].astype(out_ref.dtype)
    out_ref[:, out_dim:2 * out_dim] = y_sent.astype(out_ref.dtype)
    out_ref[:, 2 * out_dim:] = y[tm:].astype(out_ref.dtype)


_WEIGHT_KEYS = ("d_w1", "d_b1", "d_w2", "d_b2", "d_w3", "d_b3",
                "s_w1_s", "s_w1_x", "s_b1", "s_w2", "s_b2", "s_w3", "s_b3")


def _vmem_budget_bytes():
    """Generation-aware scoped-VMEM ceiling (v7x 64 MiB vs v5e/v6e 128 MiB)."""
    try:
        cap = int(pltpu.get_tpu_info().vmem_capacity_bytes)
    except Exception:
        cap = 64 << 20            # conservative (v7x) default
    return min(cap * 3 // 4, 100 << 20)


def _choose_tm(n_rows, in_dim, out_dim, weight_bytes, vmem_budget):
    """Largest row tile (multiple of 8) that fits the VMEM budget, keeping
    >= 2 grid steps when possible so both v7x TensorCores get work."""
    # Per-row VMEM cost: bf16 inputs (x, s; double-buffered) + packed f32
    # output (double-buffered) + f32/bf16 activation headroom, both branches.
    per_row = (2 * 2 * in_dim * 2
               + 2 * 3 * out_dim * 4
               + 8 * in_dim * 4)
    avail = vmem_budget - weight_bytes - (2 << 20)
    tm_cap = 1024 if vmem_budget >= (80 << 20) else 512   # v5e/v6e vs v7x
    tm = max(8, min(tm_cap, (avail // per_row) // 8 * 8))
    if n_rows >= 16:
        tm = min(tm, max(8, (n_rows // 2) // 8 * 8))
    else:
        tm = 8
    return int(tm)


def _fused_forward_2d(x2d, s2d, p, tm, vmem_limit_bytes):
    n, in_dim = x2d.shape
    out_dim = p["d_w3"].shape[1]

    weight_args = tuple(p[k] for k in _WEIGHT_KEYS)

    row_spec = pl.BlockSpec((tm, in_dim), lambda i: (i, 0))
    out_spec = pl.BlockSpec((tm, 3 * out_dim), lambda i: (i, 0))
    # Grid-invariant weight blocks: constant index_map -> fetched once;
    # single-buffered (double-buffering them only burns VMEM).
    weight_specs = [
        pl.BlockSpec(w.shape, lambda i: (0, 0), pipeline_mode=pl.Buffered(1))
        for w in weight_args
    ]

    return pl.pallas_call(
        _fused_noise_reduction_kernel,
        out_shape=jax.ShapeDtypeStruct((n, 3 * out_dim), jnp.float32),
        grid_spec=pltpu.PrefetchScalarGridSpec(
            num_scalar_prefetch=0,
            grid=(pl.cdiv(n, tm),),          # partial last block is masked
            in_specs=[row_spec, row_spec] + weight_specs,
            out_specs=out_spec,
        ),
        compiler_params=pltpu.CompilerParams(
            dimension_semantics=("parallel",),
            vmem_limit_bytes=int(vmem_limit_bytes)),
    )(x2d, s2d, *weight_args)


def _init_linear(key, fan_in, fan_out, w_dtype):
    """PyTorch nn.Linear default init: U(-1/sqrt(fan_in), 1/sqrt(fan_in)).

    Weight is returned already transposed to [in, out] and cast to w_dtype;
    bias stays float32 (it is added after the f32 MXU accumulation).
    """
    kw, kb = jax.random.split(key)
    bound = 1.0 / math.sqrt(fan_in)
    w = jax.random.uniform(kw, (fan_in, fan_out), jnp.float32, -bound, bound)
    b = jax.random.uniform(kb, (1, fan_out), jnp.float32, -bound, bound)
    return w.astype(w_dtype), b


def init_noise_reduction_params(key, in_dim, out_dim, *, w_dtype=jnp.bfloat16):
    keys = jax.random.split(key, 6)
    # decoder: in_dim -> in_dim -> in_dim//2 -> out_dim
    d_w1, d_b1 = _init_linear(keys[0], in_dim, in_dim, w_dtype)
    d_w2, d_b2 = _init_linear(keys[1], in_dim, in_dim // 2, w_dtype)
    d_w3, d_b3 = _init_linear(keys[2], in_dim // 2, out_dim, w_dtype)
    # sentence_decoder: 2*in_dim -> in_dim -> in_dim//2 -> out_dim
    s_w1, s_b1 = _init_linear(keys[3], 2 * in_dim, in_dim, w_dtype)
    s_w2, s_b2 = _init_linear(keys[4], in_dim, in_dim // 2, w_dtype)
    s_w3, s_b3 = _init_linear(keys[5], in_dim // 2, out_dim, w_dtype)
    return {
        "d_w1": d_w1, "d_b1": d_b1, "d_w2": d_w2, "d_b2": d_b2,
        "d_w3": d_w3, "d_b3": d_b3,
        # first sentence-decoder weight pre-split: cat = [sentence_noise, outputs]
        # so rows [:in_dim] multiply s, rows [in_dim:] multiply x.
        "s_w1_s": s_w1[:in_dim], "s_w1_x": s_w1[in_dim:], "s_b1": s_b1,
        "s_w2": s_w2, "s_b2": s_b2, "s_w3": s_w3, "s_b3": s_b3,
    }


def noise_reduction_forward(params, outputs, sentence_noise, *, tm=None):
    """Mirrors NoiseReduction.forward (dropout as identity).

    Returns (logits, sentence_logits, noise_logits), each of shape
    outputs.shape[:-1] + (out_dim,).
    """
    lead = outputs.shape[:-1]
    in_dim = outputs.shape[-1]
    n = int(math.prod(lead)) if lead else 1
    out_dim = params["d_w3"].shape[1]
    cdt = params["d_w1"].dtype

    # Cast to the compute dtype outside the kernel: half the input DMA bytes
    # and half the row-tile VMEM footprint (compute was already bf16).
    x = outputs.reshape(n, in_dim).astype(cdt)
    s = sentence_noise.reshape(n, in_dim).astype(cdt)

    weight_bytes = sum(int(params[k].size) * params[k].dtype.itemsize
                       for k in _WEIGHT_KEYS)
    vmem_budget = _vmem_budget_bytes()
    if tm is None:
        tm = _choose_tm(n, in_dim, out_dim, weight_bytes, vmem_budget)

    packed = _fused_forward_2d(x, s, params, tm, vmem_budget)
    return (
        packed[:, :out_dim].reshape(*lead, out_dim),
        packed[:, out_dim:2 * out_dim].reshape(*lead, out_dim),
        packed[:, 2 * out_dim:].reshape(*lead, out_dim),
    )


# ----------------------------- pure-JAX reference ---------------------------

def _mlp3_ref(x, w1, b1, w2, b2, w3, b3):
    f32 = lambda a: a.astype(jnp.float32)
    h1 = jnp.maximum(f32(x) @ f32(w1) + b1, 0.0)
    h2 = jnp.maximum(h1 @ f32(w2) + b2, 0.0)
    return h2 @ f32(w3) + b3


def _reference(params, outputs, sentence_noise):
    lead = outputs.shape[:-1]
    in_dim = outputs.shape[-1]
    n = int(math.prod(lead)) if lead else 1
    out_dim = params["d_w3"].shape[1]
    cdt = params["d_w1"].dtype
    # match the wrapper's input rounding (bf16) so the comparison measures
    # only the kernel's accumulation/layout differences
    x = outputs.reshape(n, in_dim).astype(cdt)
    s = sentence_noise.reshape(n, in_dim).astype(cdt)
    cat = jnp.concatenate([s, x], axis=-1)
    s_w1 = jnp.concatenate([params["s_w1_s"], params["s_w1_x"]], axis=0)
    dec = (params["d_w1"], params["d_b1"], params["d_w2"], params["d_b2"],
           params["d_w3"], params["d_b3"])
    sent = (s_w1, params["s_b1"], params["s_w2"], params["s_b2"],
            params["s_w3"], params["s_b3"])
    return (
        _mlp3_ref(x, *dec).reshape(*lead, out_dim),
        _mlp3_ref(cat, *sent).reshape(*lead, out_dim),
        _mlp3_ref(s, *dec).reshape(*lead, out_dim),
    )


if __name__ == "__main__":
    in_dim, out_dim = 32, 8
    batch, seq = 2, 9   # 18 rows -> tm=8, grid=3 steps, partial last block

    key = jax.random.PRNGKey(0)
    k_params, k_out, k_noise = jax.random.split(key, 3)

    params = init_noise_reduction_params(k_params, in_dim, out_dim)
    outputs = jax.random.normal(k_out, (batch, seq, in_dim), jnp.float32)
    sentence_noise = jax.random.normal(k_noise, (batch, seq, in_dim), jnp.float32)

    logits, sentence_logits, noise_logits = jax.block_until_ready(
        noise_reduction_forward(params, outputs, sentence_noise))

    # sanity check against a pure-JAX f32 reference (bf16 matmuls -> loose tol)
    ref_l, ref_s, ref_n = _reference(params, outputs, sentence_noise)
    assert logits.shape == (batch, seq, out_dim)
    assert sentence_logits.shape == (batch, seq, out_dim)
    assert noise_logits.shape == (batch, seq, out_dim)
    assert jnp.allclose(logits, ref_l, atol=2e-2, rtol=2e-2)
    assert jnp.allclose(sentence_logits, ref_s, atol=2e-2, rtol=2e-2)
    assert jnp.allclose(noise_logits, ref_n, atol=2e-2, rtol=2e-2)

    print("KERNEL_OK")
</pallas_src>

<mosaic_0001>
module attributes {stable_mosaic.version = 11 : i64} {
  func.func @_fused_noise_reduction_kernel(%arg0: i32, %arg1: memref<8x32xbf16, #tpu.memory_space<vmem>>, %arg2: memref<8x32xbf16, #tpu.memory_space<vmem>>, %arg3: memref<32x32xbf16, #tpu.memory_space<vmem>>, %arg4: memref<1x32xf32, #tpu.memory_space<vmem>>, %arg5: memref<32x16xbf16, #tpu.memory_space<vmem>>, %arg6: memref<1x16xf32, #tpu.memory_space<vmem>>, %arg7: memref<16x8xbf16, #tpu.memory_space<vmem>>, %arg8: memref<1x8xf32, #tpu.memory_space<vmem>>, %arg9: memref<32x32xbf16, #tpu.memory_space<vmem>>, %arg10: memref<32x32xbf16, #tpu.memory_space<vmem>>, %arg11: memref<1x32xf32, #tpu.memory_space<vmem>>, %arg12: memref<32x16xbf16, #tpu.memory_space<vmem>>, %arg13: memref<1x16xf32, #tpu.memory_space<vmem>>, %arg14: memref<16x8xbf16, #tpu.memory_space<vmem>>, %arg15: memref<1x8xf32, #tpu.memory_space<vmem>>, %arg16: memref<8x24xf32, #tpu.memory_space<vmem>>) attributes {dimension_semantics = [#tpu.dimension_semantics<parallel>], iteration_bounds = array<i64: 3>, scalar_prefetch = 0 : i64, scratch_operands = 0 : i64, tpu.core_type = #tpu.core_type<tc>, window_params = [{transform_indices = @transform_0, window_bounds = array<i64: 8, 32>}, {transform_indices = @transform_1, window_bounds = array<i64: 8, 32>}, {pipeline_mode = #tpu.pipeline_mode<synchronous>, transform_indices = @transform_2, window_bounds = array<i64: 32, 32>}, {pipeline_mode = #tpu.pipeline_mode<synchronous>, transform_indices = @transform_3, window_bounds = array<i64: 1, 32>}, {pipeline_mode = #tpu.pipeline_mode<synchronous>, transform_indices = @transform_4, window_bounds = array<i64: 32, 16>}, {pipeline_mode = #tpu.pipeline_mode<synchronous>, transform_indices = @transform_5, window_bounds = array<i64: 1, 16>}, {pipeline_mode = #tpu.pipeline_mode<synchronous>, transform_indices = @transform_6, window_bounds = array<i64: 16, 8>}, {pipeline_mode = #tpu.pipeline_mode<synchronous>, transform_indices = @transform_7, window_bounds = array<i64: 1, 8>}, {pipeline_mode = #tpu.pipeline_mode<synchronous>, transform_indices = @transform_8, window_bounds = array<i64: 32, 32>}, {pipeline_mode = #tpu.pipeline_mode<synchronous>, transform_indices = @transform_9, window_bounds = array<i64: 32, 32>}, {pipeline_mode = #tpu.pipeline_mode<synchronous>, transform_indices = @transform_10, window_bounds = array<i64: 1, 32>}, {pipeline_mode = #tpu.pipeline_mode<synchronous>, transform_indices = @transform_11, window_bounds = array<i64: 32, 16>}, {pipeline_mode = #tpu.pipeline_mode<synchronous>, transform_indices = @transform_12, window_bounds = array<i64: 1, 16>}, {pipeline_mode = #tpu.pipeline_mode<synchronous>, transform_indices = @transform_13, window_bounds = array<i64: 16, 8>}, {pipeline_mode = #tpu.pipeline_mode<synchronous>, transform_indices = @transform_14, window_bounds = array<i64: 1, 8>}, {transform_indices = @transform_15, window_bounds = array<i64: 8, 24>}]} {
    %c0 = arith.constant 0 : index
    %c0_0 = arith.constant 0 : index
    %0 = vector.load %arg1[%c0, %c0_0] : memref<8x32xbf16, #tpu.memory_space<vmem>>, vector<8x32xbf16>
    %c0_1 = arith.constant 0 : index
    %c0_2 = arith.constant 0 : index
    %1 = vector.load %arg2[%c0_1, %c0_2] : memref<8x32xbf16, #tpu.memory_space<vmem>>, vector<8x32xbf16>
    %2 = tpu.concatenate %0, %1 in 0 : vector<8x32xbf16>, vector<8x32xbf16> -> vector<16x32xbf16>
    %c0_3 = arith.constant 0 : index
    %c0_4 = arith.constant 0 : index
    %3 = vector.load %arg3[%c0_3, %c0_4] : memref<32x32xbf16, #tpu.memory_space<vmem>>, vector<32x32xbf16>
    %cst = arith.constant dense<0.000000e+00> : vector<16x32xf32>
    %4 = tpu.matmul %2, %3, %cst {dimension_numbers = #tpu.dot_dimension_numbers<[1], [0], [0], [1], [0, 0, 1, 1], [], []>} : vector<16x32xbf16>, vector<32x32xbf16>, vector<16x32xf32> -> vector<16x32xf32>
    %c0_5 = arith.constant 0 : index
    %c0_6 = arith.constant 0 : index
    %5 = vector.load %arg4[%c0_5, %c0_6] : memref<1x32xf32, #tpu.memory_space<vmem>>, vector<1x32xf32>
    %6 = vector.broadcast %5 : vector<1x32xf32> to vector<16x32xf32>
    %7 = arith.addf %4, %6 : vector<16x32xf32>
    %cst_7 = arith.constant 0.000000e+00 : f32
    %8 = vector.broadcast %cst_7 : f32 to vector<16x32xf32>
    %9 = arith.maximumf %7, %8 : vector<16x32xf32>
    %10 = arith.truncf %9 : vector<16x32xf32> to vector<16x32xbf16>
    %c0_8 = arith.constant 0 : index
    %c0_9 = arith.constant 0 : index
    %11 = vector.load %arg5[%c0_8, %c0_9] : memref<32x16xbf16, #tpu.memory_space<vmem>>, vector<32x16xbf16>
    %cst_10 = arith.constant dense<0.000000e+00> : vector<16x16xf32>
    %12 = tpu.matmul %10, %11, %cst_10 {dimension_numbers = #tpu.dot_dimension_numbers<[1], [0], [0], [1], [0, 0, 1, 1], [], []>} : vector<16x32xbf16>, vector<32x16xbf16>, vector<16x16xf32> -> vector<16x16xf32>
    %c0_11 = arith.constant 0 : index
    %c0_12 = arith.constant 0 : index
    %13 = vector.load %arg6[%c0_11, %c0_12] : memref<1x16xf32, #tpu.memory_space<vmem>>, vector<1x16xf32>
    %14 = vector.broadcast %13 : vector<1x16xf32> to vector<16x16xf32>
    %15 = arith.addf %12, %14 : vector<16x16xf32>
    %cst_13 = arith.constant 0.000000e+00 : f32
    %16 = vector.broadcast %cst_13 : f32 to vector<16x16xf32>
    %17 = arith.maximumf %15, %16 : vector<16x16xf32>
    %18 = arith.truncf %17 : vector<16x16xf32> to vector<16x16xbf16>
    %c0_14 = arith.constant 0 : index
    %c0_15 = arith.constant 0 : index
    %19 = vector.load %arg7[%c0_14, %c0_15] : memref<16x8xbf16, #tpu.memory_space<vmem>>, vector<16x8xbf16>
    %cst_16 = arith.constant dense<0.000000e+00> : vector<16x8xf32>
    %20 = tpu.matmul %18, %19, %cst_16 {dimension_numbers = #tpu.dot_dimension_numbers<[1], [0], [0], [1], [0, 0, 1, 1], [], []>} : vector<16x16xbf16>, vector<16x8xbf16>, vector<16x8xf32> -> vector<16x8xf32>
    %c0_17 = arith.constant 0 : index
    %c0_18 = arith.constant 0 : index
    %21 = vector.load %arg8[%c0_17, %c0_18] : memref<1x8xf32, #tpu.memory_space<vmem>>, vector<1x8xf32>
    %22 = vector.broadcast %21 : vector<1x8xf32> to vector<16x8xf32>
    %23 = arith.addf %20, %22 : vector<16x8xf32>
    %c0_19 = arith.constant 0 : index
    %c0_20 = arith.constant 0 : index
    %24 = vector.load %arg9[%c0_19, %c0_20] : memref<32x32xbf16, #tpu.memory_space<vmem>>, vector<32x32xbf16>
    %cst_21 = arith.constant dense<0.000000e+00> : vector<8x32xf32>
    %25 = tpu.matmul %1, %24, %cst_21 {dimension_numbers = #tpu.dot_dimension_numbers<[1], [0], [0], [1], [0, 0, 1, 1], [], []>} : vector<8x32xbf16>, vector<32x32xbf16>, vector<8x32xf32> -> vector<8x32xf32>
    %c0_22 = arith.constant 0 : index
    %c0_23 = arith.constant 0 : index
    %26 = vector.load %arg10[%c0_22, %c0_23] : memref<32x32xbf16, #tpu.memory_space<vmem>>, vector<32x32xbf16>
    %cst_24 = arith.constant dense<0.000000e+00> : vector<8x32xf32>
    %27 = tpu.matmul %0, %26, %cst_24 {dimension_numbers = #tpu.dot_dimension_numbers<[1], [0], [0], [1], [0, 0, 1, 1], [], []>} : vector<8x32xbf16>, vector<32x32xbf16>, vector<8x32xf32> -> vector<8x32xf32>
    %28 = arith.addf %25, %27 : vector<8x32xf32>
    %c0_25 = arith.constant 0 : index
    %c0_26 = arith.constant 0 : index
    %29 = vector.load %arg11[%c0_25, %c0_26] : memref<1x32xf32, #tpu.memory_space<vmem>>, vector<1x32xf32>
    %30 = vector.broadcast %29 : vector<1x32xf32> to vector<8x32xf32>
    %31 = arith.addf %28, %30 : vector<8x32xf32>
    %cst_27 = arith.constant 0.000000e+00 : f32
    %32 = vector.broadcast %cst_27 : f32 to vector<8x32xf32>
    %33 = arith.maximumf %31, %32 : vector<8x32xf32>
    %34 = arith.truncf %33 : vector<8x32xf32> to vector<8x32xbf16>
    %c0_28 = arith.constant 0 : index
    %c0_29 = arith.constant 0 : index
    %35 = vector.load %arg12[%c0_28, %c0_29] : memref<32x16xbf16, #tpu.memory_space<vmem>>, vector<32x16xbf16>
    %cst_30 = arith.constant dense<0.000000e+00> : vector<8x16xf32>
    %36 = tpu.matmul %34, %35, %cst_30 {dimension_numbers = #tpu.dot_dimension_numbers<[1], [0], [0], [1], [0, 0, 1, 1], [], []>} : vector<8x32xbf16>, vector<32x16xbf16>, vector<8x16xf32> -> vector<8x16xf32>
    %c0_31 = arith.constant 0 : index
    %c0_32 = arith.constant 0 : index
    %37 = vector.load %arg13[%c0_31, %c0_32] : memref<1x16xf32, #tpu.memory_space<vmem>>, vector<1x16xf32>
    %38 = vector.broadcast %37 : vector<1x16xf32> to vector<8x16xf32>
    %39 = arith.addf %36, %38 : vector<8x16xf32>
    %cst_33 = arith.constant 0.000000e+00 : f32
    %40 = vector.broadcast %cst_33 : f32 to vector<8x16xf32>
    %41 = arith.maximumf %39, %40 : vector<8x16xf32>
    %42 = arith.truncf %41 : vector<8x16xf32> to vector<8x16xbf16>
    %c0_34 = arith.constant 0 : index
    %c0_35 = arith.constant 0 : index
    %43 = vector.load %arg14[%c0_34, %c0_35] : memref<16x8xbf16, #tpu.memory_space<vmem>>, vector<16x8xbf16>
    %cst_36 = arith.constant dense<0.000000e+00> : vector<8x8xf32>
    %44 = tpu.matmul %42, %43, %cst_36 {dimension_numbers = #tpu.dot_dimension_numbers<[1], [0], [0], [1], [0, 0, 1, 1], [], []>} : vector<8x16xbf16>, vector<16x8xbf16>, vector<8x8xf32> -> vector<8x8xf32>
    %c0_37 = arith.constant 0 : index
    %c0_38 = arith.constant 0 : index
    %45 = vector.load %arg15[%c0_37, %c0_38] : memref<1x8xf32, #tpu.memory_space<vmem>>, vector<1x8xf32>
    %46 = vector.broadcast %45 : vector<1x8xf32> to vector<8x8xf32>
    %47 = arith.addf %44, %46 : vector<8x8xf32>
    %48 = vector.extract_strided_slice %23 {offsets = [0, 0], sizes = [8, 8], strides = [1, 1]} : vector<16x8xf32> to vector<8x8xf32>
    %c0_39 = arith.constant 0 : index
    %c0_40 = arith.constant 0 : index
    %49 = vector.load %arg16[%c0_39, %c0_40] : memref<8x24xf32, #tpu.memory_space<vmem>>, vector<8x8xf32>
    tpu.vector_store %arg16[%c0_39, %c0_40], %48 {strides = array<i32>} : memref<8x24xf32, #tpu.memory_space<vmem>>, vector<8x8xf32>,
    %c0_41 = arith.constant 0 : index
    %c8 = arith.constant 8 : index
    %50 = vector.load %arg16[%c0_41, %c8] : memref<8x24xf32, #tpu.memory_space<vmem>>, vector<8x8xf32>
    tpu.vector_store %arg16[%c0_41, %c8], %47 {strides = array<i32>} : memref<8x24xf32, #tpu.memory_space<vmem>>, vector<8x8xf32>,
    %51 = vector.extract_strided_slice %23 {offsets = [8, 0], sizes = [8, 8], strides = [1, 1]} : vector<16x8xf32> to vector<8x8xf32>
    %c0_42 = arith.constant 0 : index
    %c16 = arith.constant 16 : index
    %52 = vector.load %arg16[%c0_42, %c16] : memref<8x24xf32, #tpu.memory_space<vmem>>, vector<8x8xf32>
    tpu.vector_store %arg16[%c0_42, %c16], %51 {strides = array<i32>} : memref<8x24xf32, #tpu.memory_space<vmem>>, vector<8x8xf32>,
    return
  }
  func.func @transform_0(%arg0: i32) -> (i32, i32) {
    %c0_i32 = arith.constant 0 : i32
    %c0_i32_0 = arith.constant 0 : i32
    return %arg0, %c0_i32 : i32, i32
  }
  func.func @transform_1(%arg0: i32) -> (i32, i32) {
    %c0_i32 = arith.constant 0 : i32
    %c0_i32_0 = arith.constant 0 : i32
    return %arg0, %c0_i32 : i32, i32
  }
  func.func @transform_2(%arg0: i32) -> (i32, i32) {
    %c0_i32 = arith.constant 0 : i32
    %c0_i32_0 = arith.constant 0 : i32
    %c0_i32_1 = arith.constant 0 : i32
    return %c0_i32, %c0_i32_0 : i32, i32
  }
  func.func @transform_3(%arg0: i32) -> (i32, i32) {
    %c0_i32 = arith.constant 0 : i32
    %c0_i32_0 = arith.constant 0 : i32
    %c0_i32_1 = arith.constant 0 : i32
    return %c0_i32, %c0_i32_0 : i32, i32
  }
  func.func @transform_4(%arg0: i32) -> (i32, i32) {
    %c0_i32 = arith.constant 0 : i32
    %c0_i32_0 = arith.constant 0 : i32
    %c0_i32_1 = arith.constant 0 : i32
    return %c0_i32, %c0_i32_0 : i32, i32
  }
  func.func @transform_5(%arg0: i32) -> (i32, i32) {
    %c0_i32 = arith.constant 0 : i32
    %c0_i32_0 = arith.constant 0 : i32
    %c0_i32_1 = arith.constant 0 : i32
    return %c0_i32, %c0_i32_0 : i32, i32
  }
  func.func @transform_6(%arg0: i32) -> (i32, i32) {
    %c0_i32 = arith.constant 0 : i32
    %c0_i32_0 = arith.constant 0 : i32
    %c0_i32_1 = arith.constant 0 : i32
    return %c0_i32, %c0_i32_0 : i32, i32
  }
  func.func @transform_7(%arg0: i32) -> (i32, i32) {
    %c0_i32 = arith.constant 0 : i32
    %c0_i32_0 = arith.constant 0 : i32
    %c0_i32_1 = arith.constant 0 : i32
    return %c0_i32, %c0_i32_0 : i32, i32
  }
  func.func @transform_8(%arg0: i32) -> (i32, i32) {
    %c0_i32 = arith.constant 0 : i32
    %c0_i32_0 = arith.constant 0 : i32
    %c0_i32_1 = arith.constant 0 : i32
    return %c0_i32, %c0_i32_0 : i32, i32
  }
  func.func @transform_9(%arg0: i32) -> (i32, i32) {
    %c0_i32 = arith.constant 0 : i32
    %c0_i32_0 = arith.constant 0 : i32
    %c0_i32_1 = arith.constant 0 : i32
    return %c0_i32, %c0_i32_0 : i32, i32
  }
  func.func @transform_10(%arg0: i32) -> (i32, i32) {
    %c0_i32 = arith.constant 0 : i32
    %c0_i32_0 = arith.constant 0 : i32
    %c0_i32_1 = arith.constant 0 : i32
    return %c0_i32, %c0_i32_0 : i32, i32
  }
  func.func @transform_11(%arg0: i32) -> (i32, i32) {
    %c0_i32 = arith.constant 0 : i32
    %c0_i32_0 = arith.constant 0 : i32
    %c0_i32_1 = arith.constant 0 : i32
    return %c0_i32, %c0_i32_0 : i32, i32
  }
  func.func @transform_12(%arg0: i32) -> (i32, i32) {
    %c0_i32 = arith.constant 0 : i32
    %c0_i32_0 = arith.constant 0 : i32
    %c0_i32_1 = arith.constant 0 : i32
    return %c0_i32, %c0_i32_0 : i32, i32
  }
  func.func @transform_13(%arg0: i32) -> (i32, i32) {
    %c0_i32 = arith.constant 0 : i32
    %c0_i32_0 = arith.constant 0 : i32
    %c0_i32_1 = arith.constant 0 : i32
    return %c0_i32, %c0_i32_0 : i32, i32
  }
  func.func @transform_14(%arg0: i32) -> (i32, i32) {
    %c0_i32 = arith.constant 0 : i32
    %c0_i32_0 = arith.constant 0 : i32
    %c0_i32_1 = arith.constant 0 : i32
    return %c0_i32, %c0_i32_0 : i32, i32
  }
  func.func @transform_15(%arg0: i32) -> (i32, i32) {
    %c0_i32 = arith.constant 0 : i32
    %c0_i32_0 = arith.constant 0 : i32
    return %arg0, %c0_i32 : i32, i32
  }
}

</mosaic_0001>

<llo_original>
// kernel: tpu_custom_call.1
$region0: #{tpu_custom_call.1}
  #allocation0 [shape = 'u32[]', space=smem, size = 0x4, offset = 0x4, fixed_abs, tag = 'smem constant byte address 0x4 - core index']
  #allocation1 [shape = 'u32[144,128]{1,0:T(1,128)}', space=vmem, size = 0x12000, scoped, tag = 'internal scratch']
  %s0 = inlined_call_operand.vmem [shape: bf16[18,32], index: 0, kind: input, shape index: {}]
  %s1 = inlined_call_operand.vmem [shape: bf16[18,32], index: 1, kind: input, shape index: {}]
  %s2 = inlined_call_operand.vmem [shape: bf16[32,32], index: 2, kind: input, shape index: {}]
  %s3 = inlined_call_operand.hbm [shape: f32[1,32], index: 3, kind: input, shape index: {}]
  %s4 = inlined_call_operand.vmem [shape: bf16[32,16], index: 4, kind: input, shape index: {}]
  %s5 = inlined_call_operand.hbm [shape: f32[1,16], index: 5, kind: input, shape index: {}]
  %s6 = inlined_call_operand.vmem [shape: bf16[16,8], index: 6, kind: input, shape index: {}]
  %s7 = inlined_call_operand.hbm [shape: f32[1,8], index: 7, kind: input, shape index: {}]
  %s8 = inlined_call_operand.vmem [shape: bf16[32,32], index: 8, kind: input, shape index: {}]
  %s9 = inlined_call_operand.vmem [shape: bf16[32,32], index: 9, kind: input, shape index: {}]
  %s10 = inlined_call_operand.vmem [shape: f32[1,32], index: 10, kind: input, shape index: {}]
  %s11 = inlined_call_operand.vmem [shape: bf16[32,16], index: 11, kind: input, shape index: {}]
  %s12 = inlined_call_operand.vmem [shape: f32[1,16], index: 12, kind: input, shape index: {}]
  %s13 = inlined_call_operand.vmem [shape: bf16[16,8], index: 13, kind: input, shape index: {}]
  %s14 = inlined_call_operand.vmem [shape: f32[1,8], index: 14, kind: input, shape index: {}]
  %s15 = inlined_call_operand.hbm [shape: f32[18,24], index: 15, kind: output, shape index: {}]
  %s16 = sld [smem:[#allocation0]]
  $region105: #{tpu_custom_call.1} parent=0
    _
  %s18 = ssub.s32 1, %s16
  %s19 = scalar_select 0, %s18, %s16
  $region1: #{tpu_custom_call.1} parent=0
    #allocation2 [shape = 'u8[512]{0}', space=vmem, size = 0x400, scoped, tag = 'input window, operand 3, single buffered']
    #allocation3 [shape = 's32[2]{0}', space=sflag, size = 0x8, scoped, tag = 'scoped memory for tpu_custom_call.1']
    #allocation4 [shape = 's32[2]{0}', space=sflag, size = 0x8, scoped, tag = 'scoped memory for tpu_custom_call.1']
    #allocation5 [shape = 'u8[512]{0}', space=vmem, size = 0x400, scoped, tag = 'input window, operand 5, single buffered']
    #allocation6 [shape = 's32[1]{0}', space=sflag, size = 0x4, scoped, tag = 'scoped memory for tpu_custom_call.1']
    #allocation7 [shape = 'u8[512]{0}', space=vmem, size = 0x400, scoped, tag = 'input window, operand 7, single buffered']
    #allocation8 [shape = 'u8[8192]{0}', space=vmem, size = 0x2000, scoped, tag = 'output window, operand 0']
    %20 = vsyncpa [#allocation3], 0
    %21 = vsyncpa [#allocation6], 0
    %22 = vsyncpa [#allocation4], 0
    %s23 = scalar_lea.sflag [#allocation4], 1
    %24 = vsyncpa %s23, 0
    loop: start=0, step=1, limit=5
    $region2: #{tpu_custom_call.1} parent=1 // loop_pre_header
      _
    $region3: #{tpu_custom_call.1} parent=1 // loop_header
      %s26 = sphi 0, %s30
      %p27 = scmp.ge.s32.totalorder %s26, 5
      %s36 = sphi 0, %s38
      %s39 = sphi 0, %s36
      %s40 = sphi 0, %s39
      %s56 = sphi 0, %s40
      %s62 = sphi 0, %s64
      %s65 = sphi 0, %s62
      %s66 = sphi 0, %s65
      %s82 = sphi 0, %s66
      %s86 = sphi 0, %s86
      %s88 = sphi 0, %s86
      %s89 = sphi 0, %s88
      %s103 = sphi 0, %s89
      %s107 = sphi 0, %s107
      %s109 = sphi 0, %s107
      %s110 = sphi 0, %s109
      %s124 = sphi 0, %s110
      %s128 = sphi 0, %s128
      %s130 = sphi 0, %s128
      %s131 = sphi 0, %s130
      %s145 = sphi 0, %s131
      %s149 = sphi 0, %s149
      %s151 = sphi 0, %s149
      %s152 = sphi 0, %s151
      %s166 = sphi 0, %s152
      %s170 = sphi 0, %s170
      %s172 = sphi 0, %s170
      %s173 = sphi 0, %s172
      %s187 = sphi 0, %s173
      %s191 = sphi 0, %s191
      %s193 = sphi 0, %s191
      %s194 = sphi 0, %s193
      %s208 = sphi 0, %s194
      %s212 = sphi 0, %s212
      %s214 = sphi 0, %s212
      %s215 = sphi 0, %s214
      %s229 = sphi 0, %s215
      %s233 = sphi 0, %s233
      %s235 = sphi 0, %s233
      %s236 = sphi 0, %s235
      %s250 = sphi 0, %s236
      %s254 = sphi 0, %s254
      %s256 = sphi 0, %s254
      %s257 = sphi 0, %s256
      %s271 = sphi 0, %s257
      %s275 = sphi 0, %s275
      %s277 = sphi 0, %s275
      %s278 = sphi 0, %s277
      %s292 = sphi 0, %s278
      %s296 = sphi 0, %s296
      %s298 = sphi 0, %s296
      %s299 = sphi 0, %s298
      %s313 = sphi 0, %s299
      %s317 = sphi 0, %s317
      %s319 = sphi 0, %s317
      %s320 = sphi 0, %s319
      %s334 = sphi 0, %s320
      %s338 = sphi 0, %s338
      %s340 = sphi 0, %s338
      %s341 = sphi 0, %s340
      %s355 = sphi 0, %s341
      %s361 = sphi 0, %s363
      %s364 = sphi 0, %s361
      %s365 = sphi 0, %s364
      %s381 = sphi 0, %s365
    $region4: #{tpu_custom_call.1} parent=1 // loop_header_branch
      %29 = sbr.rel (%p27) target = $region8
    $region5: #{tpu_custom_call.1} parent=1 // loop_body
      %s31 = ssub.s32 %s26, 1
      %s32 = ssub.s32 %s26, 2
      %s33 = sadd.s32 %s26, 1
      %s34 = ssub.s32 %s26, %s33
      %p35 = scmp.eq.s32.totalorder %s34, 0
      %s37 = sadd.s32 %s36, 1
      %s38 = scalar_select %p35, %s36, %s37
      %p41 = pneg %p35
      %p42 = scmp.eq.s32.totalorder %s26, 2
      %p43 = por %p41, %p42
      %p44 = scmp.ne.s32.totalorder %s36, %s39
      %p45 = scmp.eq.s32.totalorder %s26, 0
      %p46 = por %p44, %p45
      %p47 = scmp.ne.s32.totalorder %s36, %s39
      %p48 = scmp.eq.s32.totalorder %s31, 2
      %p49 = por %p47, %p48
      %p50 = scmp.ne.s32.totalorder %s39, %s40
      %p51 = scmp.eq.s32.totalorder %s31, 0
      %p52 = por %p50, %p51
      %p53 = scmp.ne.s32.totalorder %s39, %s40
      %p54 = scmp.eq.s32.totalorder %s32, 2
      %p55 = por %p53, %p54
      %p57 = scmp.ne.s32.totalorder %s40, %s56
      %p58 = scmp.eq.s32.totalorder %s32, 0
      %p59 = por %p57, %p58
      %s60 = ssub.s32 %s26, %s33
      %p61 = scmp.eq.s32.totalorder %s60, 0
      %s63 = sadd.s32 %s62, 1
      %s64 = scalar_select %p61, %s62, %s63
      %p67 = pneg %p61
      %p68 = scmp.eq.s32.totalorder %s26, 2
      %p69 = por %p67, %p68
      %p70 = scmp.ne.s32.totalorder %s62, %s65
      %p71 = scmp.eq.s32.totalorder %s26, 0
      %p72 = por %p70, %p71
      %p73 = scmp.ne.s32.totalorder %s62, %s65
      %p74 = scmp.eq.s32.totalorder %s31, 2
      %p75 = por %p73, %p74
      %p76 = scmp.ne.s32.totalorder %s65, %s66
      %p77 = scmp.eq.s32.totalorder %s31, 0
      %p78 = por %p76, %p77
      %p79 = scmp.ne.s32.totalorder %s65, %s66
      %p80 = scmp.eq.s32.totalorder %s32, 2
      %p81 = por %p79, %p80
      %p83 = scmp.ne.s32.totalorder %s66, %s82
      %p84 = scmp.eq.s32.totalorder %s32, 0
      %p85 = por %p83, %p84
      %s87 = sadd.s32 %s86, 1
      %p90 = scmp.eq.s32.totalorder %s26, 2
      %p91 = scmp.ne.s32.totalorder %s86, %s88
      %p92 = scmp.eq.s32.totalorder %s26, 0
      %p93 = por %p91, %p92
      %p94 = scmp.ne.s32.totalorder %s86, %s88
      %p95 = scmp.eq.s32.totalorder %s31, 2
      %p96 = por %p94, %p95
      %p97 = scmp.ne.s32.totalorder %s88, %s89
      %p98 = scmp.eq.s32.totalorder %s31, 0
      %p99 = por %p97, %p98
      %p100 = scmp.ne.s32.totalorder %s88, %s89
      %p101 = scmp.eq.s32.totalorder %s32, 2
      %p102 = por %p100, %p101
      %p104 = scmp.ne.s32.totalorder %s89, %s103
      %p105 = scmp.eq.s32.totalorder %s32, 0
      %p106 = por %p104, %p105
      %s108 = sadd.s32 %s107, 1
      %p111 = scmp.eq.s32.totalorder %s26, 2
      %p112 = scmp.ne.s32.totalorder %s107, %s109
      %p113 = scmp.eq.s32.totalorder %s26, 0
      %p114 = por %p112, %p113
      %p115 = scmp.ne.s32.totalorder %s107, %s109
      %p116 = scmp.eq.s32.totalorder %s31, 2
      %p117 = por %p115, %p116
      %p118 = scmp.ne.s32.totalorder %s109, %s110
      %p119 = scmp.eq.s32.totalorder %s31, 0
      %p120 = por %p118, %p119
      %p121 = scmp.ne.s32.totalorder %s109, %s110
      %p122 = scmp.eq.s32.totalorder %s32, 2
      %p123 = por %p121, %p122
      %p125 = scmp.ne.s32.totalorder %s110, %s124
      %p126 = scmp.eq.s32.totalorder %s32, 0
      %p127 = por %p125, %p126
      %s129 = sadd.s32 %s128, 1
      %p132 = scmp.eq.s32.totalorder %s26, 2
      %p133 = scmp.ne.s32.totalorder %s128, %s130
      %p134 = scmp.eq.s32.totalorder %s26, 0
      %p135 = por %p133, %p134
      %p136 = scmp.ne.s32.totalorder %s128, %s130
      %p137 = scmp.eq.s32.totalorder %s31, 2
      %p138 = por %p136, %p137
      %p139 = scmp.ne.s32.totalorder %s130, %s131
      %p140 = scmp.eq.s32.totalorder %s31, 0
      %p141 = por %p139, %p140
      %p142 = scmp.ne.s32.totalorder %s130, %s131
      %p143 = scmp.eq.s32.totalorder %s32, 2
      %p144 = por %p142, %p143
      %p146 = scmp.ne.s32.totalorder %s131, %s145
      %p147 = scmp.eq.s32.totalorder %s32, 0
      %p148 = por %p146, %p147
      %s150 = sadd.s32 %s149, 1
      %p153 = scmp.eq.s32.totalorder %s26, 2
      %p154 = scmp.ne.s32.totalorder %s149, %s151
      %p155 = scmp.eq.s32.totalorder %s26, 0
      %p156 = por %p154, %p155
      %p157 = scmp.ne.s32.totalorder %s149, %s151
      %p158 = scmp.eq.s32.totalorder %s31, 2
      %p159 = por %p157, %p158
      %p160 = scmp.ne.s32.totalorder %s151, %s152
      %p161 = scmp.eq.s32.totalorder %s31, 0
      %p162 = por %p160, %p161
      %p163 = scmp.ne.s32.totalorder %s151, %s152
      %p164 = scmp.eq.s32.totalorder %s32, 2
      %p165 = por %p163, %p164
      %p167 = scmp.ne.s32.totalorder %s152, %s166
      %p168 = scmp.eq.s32.totalorder %s32, 0
      %p169 = por %p167, %p168
      %s171 = sadd.s32 %s170, 1
      %p174 = scmp.eq.s32.totalorder %s26, 2
      %p175 = scmp.ne.s32.totalorder %s170, %s172
      %p176 = scmp.eq.s32.totalorder %s26, 0
      %p177 = por %p175, %p176
      %p178 = scmp.ne.s32.totalorder %s170, %s172
      %p179 = scmp.eq.s32.totalorder %s31, 2
      %p180 = por %p178, %p179
      %p181 = scmp.ne.s32.totalorder %s172, %s173
      %p182 = scmp.eq.s32.totalorder %s31, 0
      %p183 = por %p181, %p182
      %p184 = scmp.ne.s32.totalorder %s172, %s173
      %p185 = scmp.eq.s32.totalorder %s32, 2
      %p186 = por %p184, %p185
      %p188 = scmp.ne.s32.totalorder %s173, %s187
      %p189 = scmp.eq.s32.totalorder %s32, 0
      %p190 = por %p188, %p189
      %s192 = sadd.s32 %s191, 1
      %p195 = scmp.eq.s32.totalorder %s26, 2
      %p196 = scmp.ne.s32.totalorder %s191, %s193
      %p197 = scmp.eq.s32.totalorder %s26, 0
      %p198 = por %p196, %p197
      %p199 = scmp.ne.s32.totalorder %s191, %s193
      %p200 = scmp.eq.s32.totalorder %s31, 2
      %p201 = por %p199, %p200
      %p202 = scmp.ne.s32.totalorder %s193, %s194
      %p203 = scmp.eq.s32.totalorder %s31, 0
      %p204 = por %p202, %p203
      %p205 = scmp.ne.s32.totalorder %s193, %s194
      %p206 = scmp.eq.s32.totalorder %s32, 2
      %p207 = por %p205, %p206
      %p209 = scmp.ne.s32.totalorder %s194, %s208
      %p210 = scmp.eq.s32.totalorder %s32, 0
      %p211 = por %p209, %p210
      %s213 = sadd.s32 %s212, 1
      %p216 = scmp.eq.s32.totalorder %s26, 2
      %p217 = scmp.ne.s32.totalorder %s212, %s214
      %p218 = scmp.eq.s32.totalorder %s26, 0
      %p219 = por %p217, %p218
      %p220 = scmp.ne.s32.totalorder %s212, %s214
      %p221 = scmp.eq.s32.totalorder %s31, 2
      %p222 = por %p220, %p221
      %p223 = scmp.ne.s32.totalorder %s214, %s215
      %p224 = scmp.eq.s32.totalorder %s31, 0
      %p225 = por %p223, %p224
      %p226 = scmp.ne.s32.totalorder %s214, %s215
      %p227 = scmp.eq.s32.totalorder %s32, 2
      %p228 = por %p226, %p227
      %p230 = scmp.ne.s32.totalorder %s215, %s229
      %p231 = scmp.eq.s32.totalorder %s32, 0
      %p232 = por %p230, %p231
      %s234 = sadd.s32 %s233, 1
      %p237 = scmp.eq.s32.totalorder %s26, 2
      %p238 = scmp.ne.s32.totalorder %s233, %s235
      %p239 = scmp.eq.s32.totalorder %s26, 0
      %p240 = por %p238, %p239
      %p241 = scmp.ne.s32.totalorder %s233, %s235
      %p242 = scmp.eq.s32.totalorder %s31, 2
      %p243 = por %p241, %p242
      %p244 = scmp.ne.s32.totalorder %s235, %s236
      %p245 = scmp.eq.s32.totalorder %s31, 0
      %p246 = por %p244, %p245
      %p247 = scmp.ne.s32.totalorder %s235, %s236
      %p248 = scmp.eq.s32.totalorder %s32, 2
      %p249 = por %p247, %p248
      %p251 = scmp.ne.s32.totalorder %s236, %s250
      %p252 = scmp.eq.s32.totalorder %s32, 0
      %p253 = por %p251, %p252
      %s255 = sadd.s32 %s254, 1
      %p258 = scmp.eq.s32.totalorder %s26, 2
      %p259 = scmp.ne.s32.totalorder %s254, %s256
      %p260 = scmp.eq.s32.totalorder %s26, 0
      %p261 = por %p259, %p260
      %p262 = scmp.ne.s32.totalorder %s254, %s256
      %p263 = scmp.eq.s32.totalorder %s31, 2
      %p264 = por %p262, %p263
      %p265 = scmp.ne.s32.totalorder %s256, %s257
      %p266 = scmp.eq.s32.totalorder %s31, 0
      %p267 = por %p265, %p266
      %p268 = scmp.ne.s32.totalorder %s256, %s257
      %p269 = scmp.eq.s32.totalorder %s32, 2
      %p270 = por %p268, %p269
      %p272 = scmp.ne.s32.totalorder %s257, %s271
      %p273 = scmp.eq.s32.totalorder %s32, 0
      %p274 = por %p272, %p273
      %s276 = sadd.s32 %s275, 1
      %p279 = scmp.eq.s32.totalorder %s26, 2
      %p280 = scmp.ne.s32.totalorder %s275, %s277
      %p281 = scmp.eq.s32.totalorder %s26, 0
      %p282 = por %p280, %p281
      %p283 = scmp.ne.s32.totalorder %s275, %s277
      %p284 = scmp.eq.s32.totalorder %s31, 2
      %p285 = por %p283, %p284
      %p286 = scmp.ne.s32.totalorder %s277, %s278
      %p287 = scmp.eq.s32.totalorder %s31, 0
      %p288 = por %p286, %p287
      %p289 = scmp.ne.s32.totalorder %s277, %s278
      %p290 = scmp.eq.s32.totalorder %s32, 2
      %p291 = por %p289, %p290
      %p293 = scmp.ne.s32.totalorder %s278, %s292
      %p294 = scmp.eq.s32.totalorder %s32, 0
      %p295 = por %p293, %p294
      %s297 = sadd.s32 %s296, 1
      %p300 = scmp.eq.s32.totalorder %s26, 2
      %p301 = scmp.ne.s32.totalorder %s296, %s298
      %p302 = scmp.eq.s32.totalorder %s26, 0
      %p303 = por %p301, %p302
      %p304 = scmp.ne.s32.totalorder %s296, %s298
      %p305 = scmp.eq.s32.totalorder %s31, 2
      %p306 = por %p304, %p305
      %p307 = scmp.ne.s32.totalorder %s298, %s299
      %p308 = scmp.eq.s32.totalorder %s31, 0
      %p309 = por %p307, %p308
      %p310 = scmp.ne.s32.totalorder %s298, %s299
      %p311 = scmp.eq.s32.totalorder %s32, 2
      %p312 = por %p310, %p311
      %p314 = scmp.ne.s32.totalorder %s299, %s313
      %p315 = scmp.eq.s32.totalorder %s32, 0
      %p316 = por %p314, %p315
      %s318 = sadd.s32 %s317, 1
      %p321 = scmp.eq.s32.totalorder %s26, 2
      %p322 = scmp.ne.s32.totalorder %s317, %s319
      %p323 = scmp.eq.s32.totalorder %s26, 0
      %p324 = por %p322, %p323
      %p325 = scmp.ne.s32.totalorder %s317, %s319
      %p326 = scmp.eq.s32.totalorder %s31, 2
      %p327 = por %p325, %p326
      %p328 = scmp.ne.s32.totalorder %s319, %s320
      %p329 = scmp.eq.s32.totalorder %s31, 0
      %p330 = por %p328, %p329
      %p331 = scmp.ne.s32.totalorder %s319, %s320
      %p332 = scmp.eq.s32.totalorder %s32, 2
      %p333 = por %p331, %p332
      %p335 = scmp.ne.s32.totalorder %s320, %s334
      %p336 = scmp.eq.s32.totalorder %s32, 0
      %p337 = por %p335, %p336
      %s339 = sadd.s32 %s338, 1
      %p342 = scmp.eq.s32.totalorder %s26, 2
      %p343 = scmp.ne.s32.totalorder %s338, %s340
      %p344 = scmp.eq.s32.totalorder %s26, 0
      %p345 = por %p343, %p344
      %p346 = scmp.ne.s32.totalorder %s338, %s340
      %p347 = scmp.eq.s32.totalorder %s31, 2
      %p348 = por %p346, %p347
      %p349 = scmp.ne.s32.totalorder %s340, %s341
      %p350 = scmp.eq.s32.totalorder %s31, 0
      %p351 = por %p349, %p350
      %p352 = scmp.ne.s32.totalorder %s340, %s341
      %p353 = scmp.eq.s32.totalorder %s32, 2
      %p354 = por %p352, %p353
      %p356 = scmp.ne.s32.totalorder %s341, %s355
      %p357 = scmp.eq.s32.totalorder %s32, 0
      %p358 = por %p356, %p357
      %s359 = ssub.s32 %s26, %s33
      %p360 = scmp.eq.s32.totalorder %s359, 0
      %s362 = sadd.s32 %s361, 1
      %s363 = scalar_select %p360, %s361, %s362
      %p366 = pneg %p360
      %p367 = scmp.eq.s32.totalorder %s26, 2
      %p368 = por %p366, %p367
      %p369 = scmp.ne.s32.totalorder %s361, %s364
      %p370 = scmp.eq.s32.totalorder %s26, 0
      %p371 = por %p369, %p370
      %p372 = scmp.ne.s32.totalorder %s361, %s364
      %p373 = scmp.eq.s32.totalorder %s31, 2
      %p374 = por %p372, %p373
      %p375 = scmp.ne.s32.totalorder %s364, %s365
      %p376 = scmp.eq.s32.totalorder %s31, 0
      %p377 = por %p375, %p376
      %p378 = scmp.ne.s32.totalorder %s364, %s365
      %p379 = scmp.eq.s32.totalorder %s32, 2
      %p380 = por %p378, %p379
      %p382 = scmp.ne.s32.totalorder %s365, %s381
      %p383 = scmp.eq.s32.totalorder %s32, 0
      %p384 = por %p382, %p383
      %p385 = scmp.le.s32.totalorder 1, %s26
      %p386 = scmp.lt.s32.totalorder %s26, 4
      %p387 = pnand %p385, %p386
      %p388 = pneg %p387
      // Predicated region
      $region9: #{tpu_custom_call.1} parent=5 // pred_check
        _
      $region10: #{tpu_custom_call.1} parent=5 // pred_check_branch
        %390 = sbr.rel (%p387) target = $region12
      $region11: #{tpu_custom_call.1} parent=5 // pred_region
        %s391 = ssub.s32 %s26, 1
        // Predicated region
        $region13: #{tpu_custom_call.1} parent=11 // pred_check
          %p392 = pneg %p99
        $region14: #{tpu_custom_call.1} parent=11 // pred_check_branch
          %394 = sbr.rel (%p392) target = $region16
        $region15: #{tpu_custom_call.1} parent=11 // pred_region
          _
        $region16: #{tpu_custom_call.1} parent=11 // pred_fallthru
          _
        // Predicated region
        $region17: #{tpu_custom_call.1} parent=11 // pred_check
          %p395 = pneg %p120
        $region18: #{tpu_custom_call.1} parent=11 // pred_check_branch
          %397 = sbr.rel (%p395) target = $region20
        $region19: #{tpu_custom_call.1} parent=11 // pred_region
          %s399 = ssub.s32 16, 16
          %400 = vsyncadd [#allocation3], %s399
          %s402 = sshll.u32 [#allocation2], 4
          %s403 = int_to_ptr.vmem [resolvable:$true] %s402
          %405 = dma.hbm_to_vmem [thread:$0]  %s3, 16, %s403, [#allocation3]
        $region20: #{tpu_custom_call.1} parent=11 // pred_fallthru
          _
        // Predicated region
        $region21: #{tpu_custom_call.1} parent=11 // pred_check
          %p406 = pneg %p141
        $region22: #{tpu_custom_call.1} parent=11 // pred_check_branch
          %408 = sbr.rel (%p406) target = $region24
        $region23: #{tpu_custom_call.1} parent=11 // pred_region
          _
        $region24: #{tpu_custom_call.1} parent=11 // pred_fallthru
          _
        // Predicated region
        $region25: #{tpu_custom_call.1} parent=11 // pred_check
          %p409 = pneg %p162
        $region26: #{tpu_custom_call.1} parent=11 // pred_check_branch
          %411 = sbr.rel (%p409) target = $region28
        $region27: #{tpu_custom_call.1} parent=11 // pred_region
          %s413 = ssub.s32 16, 16
          %414 = vsyncadd [#allocation6], %s413
          %s416 = sshll.u32 [#allocation5], 4
          %s417 = int_to_ptr.vmem [resolvable:$true] %s416
          %419 = dma.hbm_to_vmem [thread:$0]  %s5, 16, %s417, [#allocation6]
        $region28: #{tpu_custom_call.1} parent=11 // pred_fallthru
          _
        // Predicated region
        $region29: #{tpu_custom_call.1} parent=11 // pred_check
          %p420 = pneg %p183
        $region30: #{tpu_custom_call.1} parent=11 // pred_check_branch
          %422 = sbr.rel (%p420) target = $region32
        $region31: #{tpu_custom_call.1} parent=11 // pred_region
          _
        $region32: #{tpu_custom_call.1} parent=11 // pred_fallthru
          _
        // Predicated region
        $region33: #{tpu_custom_call.1} parent=11 // pred_check
          %p423 = pneg %p204
        $region34: #{tpu_custom_call.1} parent=11 // pred_check_branch
          %425 = sbr.rel (%p423) target = $region36
        $region35: #{tpu_custom_call.1} parent=11 // pred_region
          %s427 = ssub.s32 16, 16
          %428 = vsyncadd [#allocation6], %s427
          %s430 = sshll.u32 [#allocation7], 4
          %s431 = int_to_ptr.vmem [resolvable:$true] %s430
          %433 = dma.hbm_to_vmem [thread:$0]  %s7, 16, %s431, [#allocation6]
        $region36: #{tpu_custom_call.1} parent=11 // pred_fallthru
          _
        // Predicated region
        $region37: #{tpu_custom_call.1} parent=11 // pred_check
          %p434 = pneg %p225
        $region38: #{tpu_custom_call.1} parent=11 // pred_check_branch
          %436 = sbr.rel (%p434) target = $region40
        $region39: #{tpu_custom_call.1} parent=11 // pred_region
          _
        $region40: #{tpu_custom_call.1} parent=11 // pred_fallthru
          _
        // Predicated region
        $region41: #{tpu_custom_call.1} parent=11 // pred_check
          %p437 = pneg %p246
        $region42: #{tpu_custom_call.1} parent=11 // pred_check_branch
          %439 = sbr.rel (%p437) target = $region44
        $region43: #{tpu_custom_call.1} parent=11 // pred_region
          _
        $region44: #{tpu_custom_call.1} parent=11 // pred_fallthru
          _
        // Predicated region
        $region45: #{tpu_custom_call.1} parent=11 // pred_check
          %p440 = pneg %p267
        $region46: #{tpu_custom_call.1} parent=11 // pred_check_branch
          %442 = sbr.rel (%p440) target = $region48
        $region47: #{tpu_custom_call.1} parent=11 // pred_region
          _
        $region48: #{tpu_custom_call.1} parent=11 // pred_fallthru
          _
        // Predicated region
        $region49: #{tpu_custom_call.1} parent=11 // pred_check
          %p443 = pneg %p288
        $region50: #{tpu_custom_call.1} parent=11 // pred_check_branch
          %445 = sbr.rel (%p443) target = $region52
        $region51: #{tpu_custom_call.1} parent=11 // pred_region
          _
        $region52: #{tpu_custom_call.1} parent=11 // pred_fallthru
          _
        // Predicated region
        $region53: #{tpu_custom_call.1} parent=11 // pred_check
          %p446 = pneg %p309
        $region54: #{tpu_custom_call.1} parent=11 // pred_check_branch
          %448 = sbr.rel (%p446) target = $region56
        $region55: #{tpu_custom_call.1} parent=11 // pred_region
          _
        $region56: #{tpu_custom_call.1} parent=11 // pred_fallthru
          _
        // Predicated region
        $region57: #{tpu_custom_call.1} parent=11 // pred_check
          %p449 = pneg %p330
        $region58: #{tpu_custom_call.1} parent=11 // pred_check_branch
          %451 = sbr.rel (%p449) target = $region60
        $region59: #{tpu_custom_call.1} parent=11 // pred_region
          _
        $region60: #{tpu_custom_call.1} parent=11 // pred_fallthru
          _
        // Predicated region
        $region61: #{tpu_custom_call.1} parent=11 // pred_check
          %p452 = pneg %p351
        $region62: #{tpu_custom_call.1} parent=11 // pred_check_branch
          %454 = sbr.rel (%p452) target = $region64
        $region63: #{tpu_custom_call.1} parent=11 // pred_region
          _
        $region64: #{tpu_custom_call.1} parent=11 // pred_fallthru
          _
      $region12: #{tpu_custom_call.1} parent=5 // pred_fallthru
        _
      %p455 = scmp.lt.s32.totalorder %s26, 3
      // Predicated region
      $region65: #{tpu_custom_call.1} parent=5 // pred_check
        %p456 = pneg %p455
      $region66: #{tpu_custom_call.1} parent=5 // pred_check_branch
        %458 = sbr.rel (%p456) target = $region68
      $region67: #{tpu_custom_call.1} parent=5 // pred_region
        // Predicated region
        $region69: #{tpu_custom_call.1} parent=67 // pred_check
          %p459 = pneg %p46
        $region70: #{tpu_custom_call.1} parent=67 // pred_check_branch
          %461 = sbr.rel (%p459) target = $region72
        $region71: #{tpu_custom_call.1} parent=67 // pred_region
          %p462 = scmp.lt.s32.totalorder %s26, 2
          %s463 = scalar_select %p462, %s26, 2
          %s464 = smul.addr %s463, 4
          %s465 = scalar_lea.vmem %s0, %s464
        $region72: #{tpu_custom_call.1} parent=67 // pred_fallthru
          _
        // Predicated region
        $region73: #{tpu_custom_call.1} parent=67 // pred_check
          %p466 = pneg %p72
        $region74: #{tpu_custom_call.1} parent=67 // pred_check_branch
          %468 = sbr.rel (%p466) target = $region76
        $region75: #{tpu_custom_call.1} parent=67 // pred_region
          %p469 = scmp.lt.s32.totalorder %s26, 2
          %s470 = scalar_select %p469, %s26, 2
          %s471 = smul.addr %s470, 4
          %s472 = scalar_lea.vmem %s1, %s471
        $region76: #{tpu_custom_call.1} parent=67 // pred_fallthru
          _
      $region68: #{tpu_custom_call.1} parent=5 // pred_fallthru
        _
      %p473 = scmp.le.s32.totalorder 1, %s26
      %p474 = scmp.lt.s32.totalorder %s26, 4
      %p475 = pnand %p473, %p474
      %p476 = pneg %p475
      // Predicated region
      $region77: #{tpu_custom_call.1} parent=5 // pred_check
        _
      $region78: #{tpu_custom_call.1} parent=5 // pred_check_branch
        %478 = sbr.rel (%p475) target = $region80
      $region79: #{tpu_custom_call.1} parent=5 // pred_region
        %s479 = ssub.s32 %s26, 1
        // Predicated region
        $region81: #{tpu_custom_call.1} parent=79 // pred_check
          %p480 = pneg %p120
        $region82: #{tpu_custom_call.1} parent=79 // pred_check_branch
          %482 = sbr.rel (%p480) target = $region84
        $region83: #{tpu_custom_call.1} parent=79 // pred_region
          %483 = dma.done [#allocation3], 16
        $region84: #{tpu_custom_call.1} parent=79 // pred_fallthru
          _
        // Predicated region
        $region85: #{tpu_custom_call.1} parent=79 // pred_check
          %p484 = pneg %p162
        $region86: #{tpu_custom_call.1} parent=79 // pred_check_branch
          %486 = sbr.rel (%p484) target = $region88
        $region87: #{tpu_custom_call.1} parent=79 // pred_region
          %487 = dma.done [#allocation6], 16
        $region88: #{tpu_custom_call.1} parent=79 // pred_fallthru
          _
        // Predicated region
        $region89: #{tpu_custom_call.1} parent=79 // pred_check
          %p488 = pneg %p204
        $region90: #{tpu_custom_call.1} parent=79 // pred_check_branch
          %490 = sbr.rel (%p488) target = $region92
        $region91: #{tpu_custom_call.1} parent=79 // pred_region
          %491 = dma.done [#allocation6], 16
        $region92: #{tpu_custom_call.1} parent=79 // pred_fallthru
          _
        %p492 = scmp.lt.s32.totalorder %s31, 2
        %s493 = scalar_select %p492, %s31, 2
        %s494 = smul.addr %s493, 4
        %s495 = scalar_lea.vmem %s0, %s494
        %p496 = pneg %p52
        %p497 = pneg %p49
        %p498 = scmp.lt.s32.totalorder %s31, 2
        %s499 = scalar_select %p498, %s31, 2
        %s500 = smul.addr %s499, 4
        %s501 = scalar_lea.vmem %s1, %s500
        %p502 = pneg %p78
        %p503 = pneg %p75
        %p504 = pneg %p99
        %p505 = pneg %p96
        %p506 = pneg %p120
        %p507 = pneg %p117
        %p508 = pneg %p141
        %p509 = pneg %p138
        %p510 = pneg %p162
        %p511 = pneg %p159
        %p512 = pneg %p183
        %p513 = pneg %p180
        %p514 = pneg %p204
        %p515 = pneg %p201
        %p516 = pneg %p225
        %p517 = pneg %p222
        %p518 = pneg %p246
        %p519 = pneg %p243
        %p520 = pneg %p267
        %p521 = pneg %p264
        %p522 = pneg %p288
        %p523 = pneg %p285
        %p524 = pneg %p309
        %p525 = pneg %p306
        %p526 = pneg %p330
        %p527 = pneg %p327
        %p528 = pneg %p351
        %p529 = pneg %p348
        %p530 = pneg %p377
        %p531 = pneg %p374
        %s532 = sand.u32 %s364, 1
        %s533 = scalar_lea.sflag [#allocation4], %s532
        %s534 = sand.u32 %s364, 1
        %s535 = smul.addr %s534, 8
        %s536 = scalar_lea.vmem [#allocation8], %s535
        %p537 = scmp.lt.s32.totalorder %s31, 2
        %s538 = scalar_select %p537, %s31, 2
        %s539 = smul.addr %s538, 4
        %s540 = scalar_lea.vmem %s0, %s539
        %p541 = scmp.lt.s32.totalorder %s31, 2
        %s542 = scalar_select %p541, %s31, 2
        %s543 = smul.addr %s542, 4
        %s544 = scalar_lea.vmem %s1, %s543
        %v546 = vld [vmem:[%s540] sm:$0xf]
        %v547 = vld [vmem:[%s544] sm:$0xf]
        %v549 = vunpack.c.l.b16 %v547
        %v550 = vpack.c.b16 %v549, %v549
        %vm551 = vcmask 1043456
        %v554 = vsel %vm551, %v546, %v550
        %v555 = vld [vmem:[%s2] sm:$0xf]
        %v556 = vld [vmem:[%s2 + $0x4] sm:$0xf]
        %v557 = vld [vmem:[%s2 + $0x8] sm:$0xf]
        %v558 = vld [vmem:[%s2 + $0xc] sm:$0xf]
        %v559 = vld [vmem:[#allocation2] sm:$0x1]
        %v561 = vlaneseq
        %v562 = vshrl.u32 %v561, 7
        %v563 = vsub.s32 0, %v562
        %v564 = vrot.slane %v559, %v563
        %v570 = vunpack.c.l.b16 %v555
        %v571 = vunpack.c.l.b16 %v556
        %v572 = vunpack.c.l.b16 %v557
        %v573 = vunpack.c.l.b16 %v558
        %v574 = vpack.c.b16 %v571, %v570
        %v575 = vpack.c.b16 %v573, %v572
        %vm578 = vcmask 261120
        %v579 = vsel %vm578, %v554, 0
        %581 = vmatprep.subr.bf16.mxu0 0
        %582 = vmatpush1.bf16.msra.mxu0 0
        %583 = vmatprep.subr.bf16.mxu0 0
        %584 = vmatpush1.bf16.msra.mxu0 0
        %585 = vmatprep.subr.bf16.mxu0 0
        %586 = vmatpush1.bf16.msra.mxu0 0
        %587 = vmatprep.subr.bf16.mxu0 0
        %588 = vmatpush1.bf16.msra.mxu0 0
        %589 = vmatprep.subr.bf16.mxu0 0
        %590 = vmatpush1.bf16.msra.mxu0 0
        %591 = vmatprep.subr.bf16.mxu0 0
        %592 = vmatpush1.bf16.msra.mxu0 0
        %593 = vmatprep.subr.bf16.mxu0 0
        %594 = vmatpush1.bf16.msra.mxu0 %v575
        %595 = vmatprep.subr.bf16.mxu0 0
        %596 = vmatpush1.bf16.msra.mxu0 %v574
        %597 = vmatprep.subr.bf16.mxu0 0
        %598 = vmatpush2.bf16.msra.mxu0 0
        %599 = vmatprep.subr.bf16.mxu0 0
        %600 = vmatpush2.bf16.msra.mxu0 0
        %601 = vmatprep.subr.bf16.mxu0 0
        %602 = vmatpush2.bf16.msra.mxu0 0
        %603 = vmatprep.subr.bf16.mxu0 0
        %604 = vmatpush2.bf16.msra.mxu0 0
        %605 = vmatprep.subr.bf16.mxu0 0
        %606 = vmatpush2.bf16.msra.mxu0 0
        %607 = vmatprep.subr.bf16.mxu0 0
        %608 = vmatpush2.bf16.msra.mxu0 0
        %609 = vmatprep.subr.bf16.mxu0 0
        %610 = vmatpush2.bf16.msra.mxu0 0
        %611 = vmatprep.subr.bf16.mxu0 0
        %612 = vmatpush2.bf16.msra.mxu0 0
        %613 = vmatprep.mubr.bf16.mxu0 0
        %614 = vmatmul.mubr.bf16.gmra.mxu0 %v579
        %v615 = vpop.f32.mrf.mxu0
        %v616 = vadd.f32 %v564, %v615
        %v617 = vpop.f32.mrf.mxu0
        %v618 = vpop.f32.mrf.mxu0
        %v619 = vadd.f32 %v564, %v618
        %v620 = vpop.f32.mrf.mxu0
        %621 = vdwg.mxu0
        %v622 = vmax.f32 %v616, 0.0
        %v623 = vmax.f32 %v619, 0.0
        %v624 = vpack.c.bf16 %v623, %v622
        %v625 = vld [vmem:[%s4] sm:$0xf]
        %v626 = vld [vmem:[%s4 + $0x4] sm:$0xf]
        %v627 = vld [vmem:[%s4 + $0x8] sm:$0xf]
        %v628 = vld [vmem:[%s4 + $0xc] sm:$0xf]
        %v629 = vld [vmem:[#allocation5] sm:$0x1]
        %v631 = vlaneseq
        %v632 = vshrl.u32 %v631, 7
        %v633 = vsub.s32 0, %v632
        %v634 = vrot.slane %v629, %v633
        %v640 = vunpack.c.l.b16 %v625
        %v641 = vunpack.c.l.b16 %v626
        %v642 = vunpack.c.l.b16 %v627
        %v643 = vunpack.c.l.b16 %v628
        %v644 = vpack.c.b16 %v641, %v640
        %v645 = vpack.c.b16 %v643, %v642
        %v649 = vsel %vm578, %v624, 0
        %651 = vmatprep.subr.bf16.mxu0 0
        %652 = vmatpush1.bf16.msra.mxu0 0
        %653 = vmatprep.subr.bf16.mxu0 0
        %654 = vmatpush1.bf16.msra.mxu0 0
        %655 = vmatprep.subr.bf16.mxu0 0
        %656 = vmatpush1.bf16.msra.mxu0 0
        %657 = vmatprep.subr.bf16.mxu0 0
        %658 = vmatpush1.bf16.msra.mxu0 0
        %659 = vmatprep.subr.bf16.mxu0 0
        %660 = vmatpush1.bf16.msra.mxu0 0
        %661 = vmatprep.subr.bf16.mxu0 0
        %662 = vmatpush1.bf16.msra.mxu0 0
        %663 = vmatprep.subr.bf16.mxu0 0
        %664 = vmatpush1.bf16.msra.mxu0 %v645
        %665 = vmatprep.subr.bf16.mxu0 0
        %666 = vmatpush1.bf16.msra.mxu0 %v644
        %667 = vmatprep.subr.bf16.mxu0 0
        %668 = vmatpush2.bf16.msra.mxu0 0
        %669 = vmatprep.subr.bf16.mxu0 0
        %670 = vmatpush2.bf16.msra.mxu0 0
        %671 = vmatprep.subr.bf16.mxu0 0
        %672 = vmatpush2.bf16.msra.mxu0 0
        %673 = vmatprep.subr.bf16.mxu0 0
        %674 = vmatpush2.bf16.msra.mxu0 0
        %675 = vmatprep.subr.bf16.mxu0 0
        %676 = vmatpush2.bf16.msra.mxu0 0
        %677 = vmatprep.subr.bf16.mxu0 0
        %678 = vmatpush2.bf16.msra.mxu0 0
        %679 = vmatprep.subr.bf16.mxu0 0
        %680 = vmatpush2.bf16.msra.mxu0 0
        %681 = vmatprep.subr.bf16.mxu0 0
        %682 = vmatpush2.bf16.msra.mxu0 0
        %683 = vmatprep.mubr.bf16.mxu0 0
        %684 = vmatmul.mubr.bf16.gmra.mxu0 %v649
        %v685 = vpop.f32.mrf.mxu0
        %v686 = vadd.f32 %v634, %v685
        %v687 = vpop.f32.mrf.mxu0
        %v688 = vpop.f32.mrf.mxu0
        %v689 = vadd.f32 %v634, %v688
        %v690 = vpop.f32.mrf.mxu0
        %691 = vdwg.mxu0
        %v692 = vmax.f32 %v686, 0.0
        %v693 = vmax.f32 %v689, 0.0
        %v694 = vpack.c.bf16 %v693, %v692
        %v695 = vld [vmem:[%s6] sm:$0xf]
        %v696 = vld [vmem:[%s6 + $0x4] sm:$0xf]
        %v697 = vld [vmem:[#allocation7] sm:$0x1]
        %v699 = vlaneseq
        %v700 = vshrl.u32 %v699, 7
        %v701 = vsub.s32 0, %v700
        %v702 = vrot.slane %v697, %v701
        %v706 = vunpack.c.l.b16 %v695
        %v707 = vunpack.c.l.b16 %v696
        %v708 = vpack.c.b16 %v707, %v706
        %vm710 = vcmask 130048
        %v712 = vsel %vm710, %v694, 0
        %714 = vmatprep.subr.bf16.mxu0 0
        %715 = vmatpush1.bf16.msra.mxu0 0
        %716 = vmatprep.subr.bf16.mxu0 0
        %717 = vmatpush1.bf16.msra.mxu0 0
        %718 = vmatprep.subr.bf16.mxu0 0
        %719 = vmatpush1.bf16.msra.mxu0 0
        %720 = vmatprep.subr.bf16.mxu0 0
        %721 = vmatpush1.bf16.msra.mxu0 0
        %722 = vmatprep.subr.bf16.mxu0 0
        %723 = vmatpush1.bf16.msra.mxu0 0
        %724 = vmatprep.subr.bf16.mxu0 0
        %725 = vmatpush1.bf16.msra.mxu0 0
        %726 = vmatprep.subr.bf16.mxu0 0
        %727 = vmatpush1.bf16.msra.mxu0 0
        %728 = vmatprep.subr.bf16.mxu0 0
        %729 = vmatpush1.bf16.msra.mxu0 %v708
        %730 = vmatprep.subr.bf16.mxu0 0
        %731 = vmatpush2.bf16.msra.mxu0 0
        %732 = vmatprep.subr.bf16.mxu0 0
        %733 = vmatpush2.bf16.msra.mxu0 0
        %734 = vmatprep.subr.bf16.mxu0 0
        %735 = vmatpush2.bf16.msra.mxu0 0
        %736 = vmatprep.subr.bf16.mxu0 0
        %737 = vmatpush2.bf16.msra.mxu0 0
        %738 = vmatprep.subr.bf16.mxu0 0
        %739 = vmatpush2.bf16.msra.mxu0 0
        %740 = vmatprep.subr.bf16.mxu0 0
        %741 = vmatpush2.bf16.msra.mxu0 0
        %742 = vmatprep.subr.bf16.mxu0 0
        %743 = vmatpush2.bf16.msra.mxu0 0
        %744 = vmatprep.subr.bf16.mxu0 0
        %745 = vmatpush2.bf16.msra.mxu0 0
        %746 = vmatprep.mubr.bf16.mxu0 0
        %747 = vmatmul.mubr.bf16.gmra.mxu0 %v712
        %v748 = vpop.f32.mrf.mxu0
        %v749 = vadd.f32 %v702, %v748
        %v750 = vpop.f32.mrf.mxu0
        %v751 = vpop.f32.mrf.mxu0
        %v752 = vadd.f32 %v702, %v751
        %v753 = vpop.f32.mrf.mxu0
        %754 = vdwg.mxu0
        %v755 = vld [vmem:[%s8] sm:$0xf]
        %v756 = vld [vmem:[%s8 + $0x4] sm:$0xf]
        %v757 = vld [vmem:[%s8 + $0x8] sm:$0xf]
        %v758 = vld [vmem:[%s8 + $0xc] sm:$0xf]
        %v759 = vld [vmem:[%s9] sm:$0xf]
        %v760 = vld [vmem:[%s9 + $0x4] sm:$0xf]
        %v761 = vld [vmem:[%s9 + $0x8] sm:$0xf]
        %v762 = vld [vmem:[%s9 + $0xc] sm:$0xf]
        %v767 = vunpack.c.l.b16 %v759
        %v768 = vunpack.c.l.b16 %v760
        %v769 = vunpack.c.l.b16 %v761
        %v770 = vunpack.c.l.b16 %v762
        %v771 = vpack.c.b16 %v768, %v767
        %v772 = vpack.c.b16 %v770, %v769
        %v775 = vsel %vm578, %v546, 0
        %777 = vmatprep.subr.bf16.mxu0 0
        %778 = vmatpush1.bf16.msra.mxu0 0
        %779 = vmatprep.subr.bf16.mxu0 0
        %780 = vmatpush1.bf16.msra.mxu0 0
        %781 = vmatprep.subr.bf16.mxu0 0
        %782 = vmatpush1.bf16.msra.mxu0 0
        %783 = vmatprep.subr.bf16.mxu0 0
        %784 = vmatpush1.bf16.msra.mxu0 0
        %785 = vmatprep.subr.bf16.mxu0 0
        %786 = vmatpush1.bf16.msra.mxu0 0
        %787 = vmatprep.subr.bf16.mxu0 0
        %788 = vmatpush1.bf16.msra.mxu0 0
        %789 = vmatprep.subr.bf16.mxu0 0
        %790 = vmatpush1.bf16.msra.mxu0 %v772
        %791 = vmatprep.subr.bf16.mxu0 0
        %792 = vmatpush1.bf16.msra.mxu0 %v771
        %793 = vmatprep.subr.bf16.mxu0 0
        %794 = vmatpush2.bf16.msra.mxu0 0
        %795 = vmatprep.subr.bf16.mxu0 0
        %796 = vmatpush2.bf16.msra.mxu0 0
        %797 = vmatprep.subr.bf16.mxu0 0
        %798 = vmatpush2.bf16.msra.mxu0 0
        %799 = vmatprep.subr.bf16.mxu0 0
        %800 = vmatpush2.bf16.msra.mxu0 0
        %801 = vmatprep.subr.bf16.mxu0 0
        %802 = vmatpush2.bf16.msra.mxu0 0
        %803 = vmatprep.subr.bf16.mxu0 0
        %804 = vmatpush2.bf16.msra.mxu0 0
        %805 = vmatprep.subr.bf16.mxu0 0
        %806 = vmatpush2.bf16.msra.mxu0 0
        %807 = vmatprep.subr.bf16.mxu0 0
        %808 = vmatpush2.bf16.msra.mxu0 0
        %809 = vmatprep.mubr.bf16.mxu0 0
        %810 = vmatmul.mubr.bf16.gmra.mxu0 %v775
        %v811 = vpop.f32.mrf.mxu0
        %v812 = vadd.f32 0.0, %v811
        %v813 = vpop.f32.mrf.mxu0
        %v814 = vpop.f32.mrf.mxu0
        %v815 = vpop.f32.mrf.mxu0
        %816 = vdwg.mxu0
        %v821 = vunpack.c.l.b16 %v755
        %v822 = vunpack.c.l.b16 %v756
        %v823 = vunpack.c.l.b16 %v757
        %v824 = vunpack.c.l.b16 %v758
        %v825 = vpack.c.b16 %v822, %v821
        %v826 = vpack.c.b16 %v824, %v823
        %v830 = vsel %vm578, %v547, 0
        %832 = vmatprep.subr.bf16.mxu0 0
        %833 = vmatpush1.bf16.msra.mxu0 0
        %834 = vmatprep.subr.bf16.mxu0 0
        %835 = vmatpush1.bf16.msra.mxu0 0
        %836 = vmatprep.subr.bf16.mxu0 0
        %837 = vmatpush1.bf16.msra.mxu0 0
        %838 = vmatprep.subr.bf16.mxu0 0
        %839 = vmatpush1.bf16.msra.mxu0 0
        %840 = vmatprep.subr.bf16.mxu0 0
        %841 = vmatpush1.bf16.msra.mxu0 0
        %842 = vmatprep.subr.bf16.mxu0 0
        %843 = vmatpush1.bf16.msra.mxu0 0
        %844 = vmatprep.subr.bf16.mxu0 0
        %845 = vmatpush1.bf16.msra.mxu0 %v826
        %846 = vmatprep.subr.bf16.mxu0 0
        %847 = vmatpush1.bf16.msra.mxu0 %v825
        %848 = vmatprep.subr.bf16.mxu0 0
        %849 = vmatpush2.bf16.msra.mxu0 0
        %850 = vmatprep.subr.bf16.mxu0 0
        %851 = vmatpush2.bf16.msra.mxu0 0
        %852 = vmatprep.subr.bf16.mxu0 0
        %853 = vmatpush2.bf16.msra.mxu0 0
        %854 = vmatprep.subr.bf16.mxu0 0
        %855 = vmatpush2.bf16.msra.mxu0 0
        %856 = vmatprep.subr.bf16.mxu0 0
        %857 = vmatpush2.bf16.msra.mxu0 0
        %858 = vmatprep.subr.bf16.mxu0 0
        %859 = vmatpush2.bf16.msra.mxu0 0
        %860 = vmatprep.subr.bf16.mxu0 0
        %861 = vmatpush2.bf16.msra.mxu0 0
        %862 = vmatprep.subr.bf16.mxu0 0
        %863 = vmatpush2.bf16.msra.mxu0 0
        %864 = vmatprep.mubr.bf16.mxu0 0
        %865 = vmatmul.mubr.bf16.gmra.mxu0 %v830
        %v866 = vpop.f32.mrf.mxu0
        %v867 = vadd.f32 %v812, %v866
        %v868 = vpop.f32.mrf.mxu0
        %v869 = vpop.f32.mrf.mxu0
        %v870 = vpop.f32.mrf.mxu0
        %871 = vdwg.mxu0
        %v872 = vld [vmem:[%s10] sm:$0x1]
        %v874 = vlaneseq
        %v875 = vshrl.u32 %v874, 7
        %v876 = vsub.s32 0, %v875
        %v877 = vrot.slane %v872, %v876
        %v879 = vadd.f32 %v867, %v877
        %v880 = vmax.f32 %v879, 0.0
        %v881 = vpack.c.bf16 %v880, %v880
        %v882 = vld [vmem:[%s11] sm:$0xf]
        %v883 = vld [vmem:[%s11 + $0x4] sm:$0xf]
        %v884 = vld [vmem:[%s11 + $0x8] sm:$0xf]
        %v885 = vld [vmem:[%s11 + $0xc] sm:$0xf]
        %v886 = vld [vmem:[%s12] sm:$0x1]
        %v888 = vlaneseq
        %v889 = vshrl.u32 %v888, 7
        %v890 = vsub.s32 0, %v889
        %v891 = vrot.slane %v886, %v890
        %v897 = vunpack.c.l.b16 %v882
        %v898 = vunpack.c.l.b16 %v883
        %v899 = vunpack.c.l.b16 %v884
        %v900 = vunpack.c.l.b16 %v885
        %v901 = vpack.c.b16 %v898, %v897
        %v902 = vpack.c.b16 %v900, %v899
        %v906 = vsel %vm578, %v881, 0
        %908 = vmatprep.subr.bf16.mxu0 0
        %909 = vmatpush1.bf16.msra.mxu0 0
        %910 = vmatprep.subr.bf16.mxu0 0
        %911 = vmatpush1.bf16.msra.mxu0 0
        %912 = vmatprep.subr.bf16.mxu0 0
        %913 = vmatpush1.bf16.msra.mxu0 0
        %914 = vmatprep.subr.bf16.mxu0 0
        %915 = vmatpush1.bf16.msra.mxu0 0
        %916 = vmatprep.subr.bf16.mxu0 0
        %917 = vmatpush1.bf16.msra.mxu0 0
        %918 = vmatprep.subr.bf16.mxu0 0
        %919 = vmatpush1.bf16.msra.mxu0 0
        %920 = vmatprep.subr.bf16.mxu0 0
        %921 = vmatpush1.bf16.msra.mxu0 %v902
        %922 = vmatprep.subr.bf16.mxu0 0
        %923 = vmatpush1.bf16.msra.mxu0 %v901
        %924 = vmatprep.subr.bf16.mxu0 0
        %925 = vmatpush2.bf16.msra.mxu0 0
        %926 = vmatprep.subr.bf16.mxu0 0
        %927 = vmatpush2.bf16.msra.mxu0 0
        %928 = vmatprep.subr.bf16.mxu0 0
        %929 = vmatpush2.bf16.msra.mxu0 0
        %930 = vmatprep.subr.bf16.mxu0 0
        %931 = vmatpush2.bf16.msra.mxu0 0
        %932 = vmatprep.subr.bf16.mxu0 0
        %933 = vmatpush2.bf16.msra.mxu0 0
        %934 = vmatprep.subr.bf16.mxu0 0
        %935 = vmatpush2.bf16.msra.mxu0 0
        %936 = vmatprep.subr.bf16.mxu0 0
        %937 = vmatpush2.bf16.msra.mxu0 0
        %938 = vmatprep.subr.bf16.mxu0 0
        %939 = vmatpush2.bf16.msra.mxu0 0
        %940 = vmatprep.mubr.bf16.mxu0 0
        %941 = vmatmul.mubr.bf16.gmra.mxu0 %v906
        %v942 = vpop.f32.mrf.mxu0
        %v943 = vadd.f32 %v891, %v942
        %v944 = vpop.f32.mrf.mxu0
        %v945 = vpop.f32.mrf.mxu0
        %v946 = vpop.f32.mrf.mxu0
        %947 = vdwg.mxu0
        %v948 = vmax.f32 %v943, 0.0
        %v949 = vpack.c.bf16 %v948, %v948
        %v950 = vld [vmem:[%s13] sm:$0xf]
        %v951 = vld [vmem:[%s13 + $0x4] sm:$0xf]
        %v952 = vld [vmem:[%s14] sm:$0x1]
        %v954 = vlaneseq
        %v955 = vshrl.u32 %v954, 7
        %v956 = vsub.s32 0, %v955
        %v957 = vrot.slane %v952, %v956
        %v961 = vunpack.c.l.b16 %v950
        %v962 = vunpack.c.l.b16 %v951
        %v963 = vpack.c.b16 %v962, %v961
        %v966 = vsel %vm710, %v949, 0
        %968 = vmatprep.subr.bf16.mxu0 0
        %969 = vmatpush1.bf16.msra.mxu0 0
        %970 = vmatprep.subr.bf16.mxu0 0
        %971 = vmatpush1.bf16.msra.mxu0 0
        %972 = vmatprep.subr.bf16.mxu0 0
        %973 = vmatpush1.bf16.msra.mxu0 0
        %974 = vmatprep.subr.bf16.mxu0 0
        %975 = vmatpush1.bf16.msra.mxu0 0
        %976 = vmatprep.subr.bf16.mxu0 0
        %977 = vmatpush1.bf16.msra.mxu0 0
        %978 = vmatprep.subr.bf16.mxu0 0
        %979 = vmatpush1.bf16.msra.mxu0 0
        %980 = vmatprep.subr.bf16.mxu0 0
        %981 = vmatpush1.bf16.msra.mxu0 0
        %982 = vmatprep.subr.bf16.mxu0 0
        %983 = vmatpush1.bf16.msra.mxu0 %v963
        %984 = vmatprep.subr.bf16.mxu0 0
        %985 = vmatpush2.bf16.msra.mxu0 0
        %986 = vmatprep.subr.bf16.mxu0 0
        %987 = vmatpush2.bf16.msra.mxu0 0
        %988 = vmatprep.subr.bf16.mxu0 0
        %989 = vmatpush2.bf16.msra.mxu0 0
        %990 = vmatprep.subr.bf16.mxu0 0
        %991 = vmatpush2.bf16.msra.mxu0 0
        %992 = vmatprep.subr.bf16.mxu0 0
        %993 = vmatpush2.bf16.msra.mxu0 0
        %994 = vmatprep.subr.bf16.mxu0 0
        %995 = vmatpush2.bf16.msra.mxu0 0
        %996 = vmatprep.subr.bf16.mxu0 0
        %997 = vmatpush2.bf16.msra.mxu0 0
        %998 = vmatprep.subr.bf16.mxu0 0
        %999 = vmatpush2.bf16.msra.mxu0 0
        %1000 = vmatprep.mubr.bf16.mxu0 0
        %1001 = vmatmul.mubr.bf16.gmra.mxu0 %v966
        %v1002 = vpop.f32.mrf.mxu0
        %v1003 = vadd.f32 %v957, %v1002
        %v1004 = vpop.f32.mrf.mxu0
        %v1005 = vpop.f32.mrf.mxu0
        %v1006 = vpop.f32.mrf.mxu0
        %1007 = vdwg.mxu0
        %vm1008 = vcmask 64512
        %1009 = vst.msk [vmem:[%s536] sm:$0xff] %vm1008, %v749
        %1011 = vrot.lane.b32.xlu0 %v1003, 8
        %v1012 = vpop.permute.xlu0 %1011
        %vm1014 = vcmask 130112
        %1015 = vst.msk [vmem:[%s536] sm:$0xff] %vm1014, %v1012
        %1017 = vrot.lane.b32.xlu0 %v752, 16
        %v1018 = vpop.permute.xlu0 %1017
        %vm1020 = vcmask 195712
        %1021 = vst.msk [vmem:[%s536] sm:$0xff] %vm1020, %v1018
        %s1022 = sand.u32 %s364, 1
        %s1023 = scalar_lea.sflag [#allocation4], %s1022
        %s1024 = sand.u32 %s364, 1
        %s1025 = smul.addr %s1024, 8
        %s1026 = scalar_lea.vmem [#allocation8], %s1025
        // Predicated region
        $region93: #{tpu_custom_call.1} parent=79 // pred_check
          %p1027 = pneg %p374
        $region94: #{tpu_custom_call.1} parent=79 // pred_check_branch
          %1029 = sbr.rel (%p1027) target = $region96
        $region95: #{tpu_custom_call.1} parent=79 // pred_region
          %s1031 = ssub.s32 128, 128
          %1032 = vsyncadd %s1023, %s1031
          %s1033 = smul.addr %s31, 128
          %s1034 = scalar_lea.hbm %s15, %s1033
          %s1036 = sshll.u32 %s1026, 4
          %s1037 = int_to_ptr.vmem [resolvable:$true] %s1036
          %1039 = dma.vmem_to_hbm [thread:$0]  %s1037, 128, %s1034, %s1023
        $region96: #{tpu_custom_call.1} parent=79 // pred_fallthru
          _
      $region80: #{tpu_custom_call.1} parent=5 // pred_fallthru
        _
      %p1040 = scmp.le.s32.totalorder 2, %s26
      // Predicated region
      $region97: #{tpu_custom_call.1} parent=5 // pred_check
        %p1041 = pneg %p1040
      $region98: #{tpu_custom_call.1} parent=5 // pred_check_branch
        %1043 = sbr.rel (%p1041) target = $region100
      $region99: #{tpu_custom_call.1} parent=5 // pred_region
        %s1044 = ssub.s32 %s26, 2
        // Predicated region
        $region101: #{tpu_custom_call.1} parent=99 // pred_check
          %p1045 = pneg %p380
        $region102: #{tpu_custom_call.1} parent=99 // pred_check_branch
          %1047 = sbr.rel (%p1045) target = $region104
        $region103: #{tpu_custom_call.1} parent=99 // pred_region
          %s1048 = sand.u32 %s365, 1
          %s1049 = scalar_lea.sflag [#allocation4], %s1048
          %s1050 = sand.u32 %s365, 1
          %s1051 = smul.addr %s1050, 8
          %s1052 = scalar_lea.vmem [#allocation8], %s1051
          %1053 = dma.done %s1049, 128
        $region104: #{tpu_custom_call.1} parent=99 // pred_fallthru
          _
      $region100: #{tpu_custom_call.1} parent=5 // pred_fallthru
        _
    $region6: #{tpu_custom_call.1} parent=1 // loop_footer
      %s30 = sadd.s32 1, %s26
    $region7: #{tpu_custom_call.1} parent=1 // loop_footer_branch
      %25 = sbr.rel target = $region3
    $region8: #{tpu_custom_call.1} parent=1 // loop_exit
      _
    %1054 = vsyncpa [#allocation3], 1
    %s1055 = scalar_lea.sflag [#allocation3], 1
    %1056 = vsyncpa %s1055, 1
    %1057 = vsyncpa [#allocation6], 1
    %1058 = vsyncpa [#allocation4], 1
    %s1059 = scalar_lea.sflag [#allocation4], 1
    %1060 = vsyncpa %s1059, 1

</llo_original>
